<compile_context>
chip_gen: v7x
topology: tpu7x:2x2x1
jax: 0.10.0
libtpu: 0.0.40
codegen_flags: <defaults>
</compile_context>

<pallas_src>
import jax
import jax.numpy as jnp
from jax.experimental import pallas as pl
from jax.experimental.pallas import tpu as pltpu

LANE = 128  # padded feature width for every layer (lane-dense vregs)


def qnetwork_kernel(x_ref, w1_ref, w2_ref, w3_ref, w4_ref, b_ref, out_ref):
    """relu(relu(relu(x@W1+b1)@W2+b2)@W3+b3)@W4+b4, feature dims padded to 128."""
    b = b_ref[...]                       # (4, 128) f32, one row per layer bias
    x = x_ref[...].astype(jnp.bfloat16)  # (TB, state_size)

    h = jnp.dot(x, w1_ref[...], preferred_element_type=jnp.float32) + b[0:1, :]
    h = jnp.maximum(h, 0.0)

    h = jnp.dot(h.astype(jnp.bfloat16), w2_ref[...],
                preferred_element_type=jnp.float32) + b[1:2, :]
    h = jnp.maximum(h, 0.0)

    h = jnp.dot(h.astype(jnp.bfloat16), w3_ref[...],
                preferred_element_type=jnp.float32) + b[2:3, :]
    h = jnp.maximum(h, 0.0)

    out = jnp.dot(h.astype(jnp.bfloat16), w4_ref[...],
                  preferred_element_type=jnp.float32) + b[3:4, :]
    out_ref[...] = out.astype(out_ref.dtype)


def _round_up(n, m):
    return (n + m - 1) // m * m


def pack_qnetwork_params(params):
    """Zero-pad every layer to 128 output lanes (and 128 input rows where the
    preceding activation is padded), cast weights to bf16 for the MXU, and
    stack the four biases into a single (4, 128) f32 buffer."""
    def pad2d(a, rows, cols):
        r, c = a.shape
        return jnp.pad(a, ((0, rows - r), (0, cols - c)))

    def pad1d(a):
        return jnp.pad(a, (0, LANE - a.shape[0]))

    state_size = params["w1"].shape[0]
    w1 = pad2d(params["w1"], state_size, LANE).astype(jnp.bfloat16)
    w2 = pad2d(params["w2"], LANE, LANE).astype(jnp.bfloat16)
    w3 = pad2d(params["w3"], LANE, LANE).astype(jnp.bfloat16)
    w4 = pad2d(params["w4"], LANE, LANE).astype(jnp.bfloat16)
    b = jnp.stack([pad1d(params["b1"]), pad1d(params["b2"]),
                   pad1d(params["b3"]), pad1d(params["b4"])]).astype(jnp.float32)
    return w1, w2, w3, w4, b


def qnetwork_forward(x, params, *, max_batch_tile=256):
    """Fused QNetwork forward pass.

    x: (batch, state_size) float32
    params: dict with w1..w4 stored as (in_features, out_features) — the
            transpose of PyTorch nn.Linear weights — and b1..b4 as (out,).
    Returns (batch, action_size) float32.
    """
    batch, state_size = x.shape
    action_size = params["w4"].shape[1]

    w1, w2, w3, w4, b = pack_qnetwork_params(params)

    # Batch tile: multiple of 8 (sublane rule); 256 fills the MXU M-dim on
    # v6e/v7x once the batch is large enough, smaller batches use one tile.
    tb = min(max_batch_tile, _round_up(batch, 8))
    padded_batch = _round_up(batch, tb)
    if padded_batch != batch:
        x = jnp.pad(x, ((0, padded_batch - batch), (0, 0)))
    grid = (padded_batch // tb,)

    flops = 2 * padded_batch * (state_size * LANE + 3 * LANE * LANE)
    bytes_accessed = (
        padded_batch * state_size * 4                     # x in (f32)
        + sum(int(w.size) * 2 for w in (w1, w2, w3, w4))  # bf16 weights
        + int(b.size) * 4                                 # packed biases
        + padded_batch * LANE * 4                         # padded output
    )

    out = pl.pallas_call(
        qnetwork_kernel,
        out_shape=jax.ShapeDtypeStruct((padded_batch, LANE), jnp.float32),
        grid_spec=pltpu.PrefetchScalarGridSpec(
            num_scalar_prefetch=0,
            grid=grid,
            in_specs=[
                pl.BlockSpec((tb, state_size), lambda i: (i, 0)),    # x: streamed per tile
                pl.BlockSpec((state_size, LANE), lambda i: (0, 0)),  # W1: VMEM-resident
                pl.BlockSpec((LANE, LANE), lambda i: (0, 0)),        # W2
                pl.BlockSpec((LANE, LANE), lambda i: (0, 0)),        # W3
                pl.BlockSpec((LANE, LANE), lambda i: (0, 0)),        # W4
                pl.BlockSpec((4, LANE), lambda i: (0, 0)),           # packed biases
            ],
            out_specs=pl.BlockSpec((tb, LANE), lambda i: (i, 0)),    # lane-dense output
        ),
        compiler_params=pltpu.CompilerParams(
            dimension_semantics=("parallel",)),
        cost_estimate=pl.CostEstimate(
            flops=flops, transcendentals=0, bytes_accessed=bytes_accessed),
    )(x, w1, w2, w3, w4, b)

    return out[:batch, :action_size]


def init_qnetwork_params(key, state_size, action_size):
    """Deterministic init mimicking PyTorch nn.Linear default:
    U(-1/sqrt(fan_in), 1/sqrt(fan_in)) for both weights and biases.
    Weights stored as (in_features, out_features) so y = x @ W + b."""
    dims = [(state_size, 64), (64, 128), (128, 64), (64, action_size)]
    params = {}
    keys = jax.random.split(key, 2 * len(dims))
    for i, (fan_in, fan_out) in enumerate(dims):
        bound = 1.0 / jnp.sqrt(jnp.float32(fan_in))
        params[f"w{i + 1}"] = jax.random.uniform(
            keys[2 * i], (fan_in, fan_out),
            minval=-bound, maxval=bound, dtype=jnp.float32)
        params[f"b{i + 1}"] = jax.random.uniform(
            keys[2 * i + 1], (fan_out,),
            minval=-bound, maxval=bound, dtype=jnp.float32)
    return params


if __name__ == "__main__":
    state_size = 16
    action_size = 4
    batch = 8

    key = jax.random.PRNGKey(0)
    k_params, k_x = jax.random.split(key)

    params = init_qnetwork_params(k_params, state_size, action_size)
    x = jax.random.normal(k_x, (batch, state_size), dtype=jnp.float32)

    out = qnetwork_forward(x, params)
    out = jax.block_until_ready(out)

    # Pure-JAX f32 reference of the original module's math.
    h = jnp.maximum(x @ params["w1"] + params["b1"], 0.0)
    h = jnp.maximum(h @ params["w2"] + params["b2"], 0.0)
    h = jnp.maximum(h @ params["w3"] + params["b3"], 0.0)
    ref = h @ params["w4"] + params["b4"]

    assert out.shape == (batch, action_size)
    # bf16 matmul operands with f32 accumulation -> loosened tolerance vs f32 ref.
    assert jnp.allclose(out, ref, atol=5e-2, rtol=5e-2), float(
        jnp.max(jnp.abs(out - ref)))

    print("KERNEL_OK")
</pallas_src>

<mosaic_0001>
module attributes {stable_mosaic.version = 11 : i64} {
  func.func @qnetwork_kernel(%arg0: i32, %arg1: memref<8x16xf32, #tpu.memory_space<vmem>>, %arg2: memref<16x128xbf16, #tpu.memory_space<vmem>>, %arg3: memref<128x128xbf16, #tpu.memory_space<vmem>>, %arg4: memref<128x128xbf16, #tpu.memory_space<vmem>>, %arg5: memref<128x128xbf16, #tpu.memory_space<vmem>>, %arg6: memref<4x128xf32, #tpu.memory_space<vmem>>, %arg7: memref<8x128xf32, #tpu.memory_space<vmem>>) attributes {dimension_semantics = [#tpu.dimension_semantics<parallel>], iteration_bounds = array<i64: 1>, scalar_prefetch = 0 : i64, scratch_operands = 0 : i64, tpu.core_type = #tpu.core_type<tc>, window_params = [{transform_indices = @transform_0, window_bounds = array<i64: 8, 16>}, {pipeline_mode = #tpu.pipeline_mode<synchronous>, transform_indices = @transform_1, window_bounds = array<i64: 16, 128>}, {pipeline_mode = #tpu.pipeline_mode<synchronous>, transform_indices = @transform_2, window_bounds = array<i64: 128, 128>}, {pipeline_mode = #tpu.pipeline_mode<synchronous>, transform_indices = @transform_3, window_bounds = array<i64: 128, 128>}, {pipeline_mode = #tpu.pipeline_mode<synchronous>, transform_indices = @transform_4, window_bounds = array<i64: 128, 128>}, {pipeline_mode = #tpu.pipeline_mode<synchronous>, transform_indices = @transform_5, window_bounds = array<i64: 4, 128>}, {transform_indices = @transform_6, window_bounds = array<i64: 8, 128>}]} {
    %c0 = arith.constant 0 : index
    %c0_0 = arith.constant 0 : index
    %0 = vector.load %arg6[%c0, %c0_0] : memref<4x128xf32, #tpu.memory_space<vmem>>, vector<4x128xf32>
    %c0_1 = arith.constant 0 : index
    %c0_2 = arith.constant 0 : index
    %1 = vector.load %arg1[%c0_1, %c0_2] : memref<8x16xf32, #tpu.memory_space<vmem>>, vector<8x16xf32>
    %2 = arith.truncf %1 : vector<8x16xf32> to vector<8x16xbf16>
    %c0_3 = arith.constant 0 : index
    %c0_4 = arith.constant 0 : index
    %3 = vector.load %arg2[%c0_3, %c0_4] : memref<16x128xbf16, #tpu.memory_space<vmem>>, vector<16x128xbf16>
    %cst = arith.constant dense<0.000000e+00> : vector<8x128xf32>
    %4 = tpu.matmul %2, %3, %cst {dimension_numbers = #tpu.dot_dimension_numbers<[1], [0], [0], [1], [0, 0, 1, 1], [], []>} : vector<8x16xbf16>, vector<16x128xbf16>, vector<8x128xf32> -> vector<8x128xf32>
    %5 = vector.extract_strided_slice %0 {offsets = [0, 0], sizes = [1, 128], strides = [1, 1]} : vector<4x128xf32> to vector<1x128xf32>
    %6 = vector.broadcast %5 : vector<1x128xf32> to vector<8x128xf32>
    %7 = arith.addf %4, %6 : vector<8x128xf32>
    %cst_5 = arith.constant 0.000000e+00 : f32
    %8 = vector.broadcast %cst_5 : f32 to vector<8x128xf32>
    %9 = arith.maximumf %7, %8 : vector<8x128xf32>
    %10 = arith.truncf %9 : vector<8x128xf32> to vector<8x128xbf16>
    %c0_6 = arith.constant 0 : index
    %c0_7 = arith.constant 0 : index
    %11 = vector.load %arg3[%c0_6, %c0_7] : memref<128x128xbf16, #tpu.memory_space<vmem>>, vector<128x128xbf16>
    %cst_8 = arith.constant dense<0.000000e+00> : vector<8x128xf32>
    %12 = tpu.matmul %10, %11, %cst_8 {dimension_numbers = #tpu.dot_dimension_numbers<[1], [0], [0], [1], [0, 0, 1, 1], [], []>} : vector<8x128xbf16>, vector<128x128xbf16>, vector<8x128xf32> -> vector<8x128xf32>
    %13 = vector.extract_strided_slice %0 {offsets = [1, 0], sizes = [1, 128], strides = [1, 1]} : vector<4x128xf32> to vector<1x128xf32>
    %14 = vector.broadcast %13 : vector<1x128xf32> to vector<8x128xf32>
    %15 = arith.addf %12, %14 : vector<8x128xf32>
    %cst_9 = arith.constant 0.000000e+00 : f32
    %16 = vector.broadcast %cst_9 : f32 to vector<8x128xf32>
    %17 = arith.maximumf %15, %16 : vector<8x128xf32>
    %18 = arith.truncf %17 : vector<8x128xf32> to vector<8x128xbf16>
    %c0_10 = arith.constant 0 : index
    %c0_11 = arith.constant 0 : index
    %19 = vector.load %arg4[%c0_10, %c0_11] : memref<128x128xbf16, #tpu.memory_space<vmem>>, vector<128x128xbf16>
    %cst_12 = arith.constant dense<0.000000e+00> : vector<8x128xf32>
    %20 = tpu.matmul %18, %19, %cst_12 {dimension_numbers = #tpu.dot_dimension_numbers<[1], [0], [0], [1], [0, 0, 1, 1], [], []>} : vector<8x128xbf16>, vector<128x128xbf16>, vector<8x128xf32> -> vector<8x128xf32>
    %21 = vector.extract_strided_slice %0 {offsets = [2, 0], sizes = [1, 128], strides = [1, 1]} : vector<4x128xf32> to vector<1x128xf32>
    %22 = vector.broadcast %21 : vector<1x128xf32> to vector<8x128xf32>
    %23 = arith.addf %20, %22 : vector<8x128xf32>
    %cst_13 = arith.constant 0.000000e+00 : f32
    %24 = vector.broadcast %cst_13 : f32 to vector<8x128xf32>
    %25 = arith.maximumf %23, %24 : vector<8x128xf32>
    %26 = arith.truncf %25 : vector<8x128xf32> to vector<8x128xbf16>
    %c0_14 = arith.constant 0 : index
    %c0_15 = arith.constant 0 : index
    %27 = vector.load %arg5[%c0_14, %c0_15] : memref<128x128xbf16, #tpu.memory_space<vmem>>, vector<128x128xbf16>
    %cst_16 = arith.constant dense<0.000000e+00> : vector<8x128xf32>
    %28 = tpu.matmul %26, %27, %cst_16 {dimension_numbers = #tpu.dot_dimension_numbers<[1], [0], [0], [1], [0, 0, 1, 1], [], []>} : vector<8x128xbf16>, vector<128x128xbf16>, vector<8x128xf32> -> vector<8x128xf32>
    %29 = vector.extract_strided_slice %0 {offsets = [3, 0], sizes = [1, 128], strides = [1, 1]} : vector<4x128xf32> to vector<1x128xf32>
    %30 = vector.broadcast %29 : vector<1x128xf32> to vector<8x128xf32>
    %31 = arith.addf %28, %30 : vector<8x128xf32>
    %c0_17 = arith.constant 0 : index
    %c0_18 = arith.constant 0 : index
    %32 = vector.load %arg7[%c0_17, %c0_18] : memref<8x128xf32, #tpu.memory_space<vmem>>, vector<8x128xf32>
    tpu.vector_store %arg7[%c0_17, %c0_18], %31 {strides = array<i32>} : memref<8x128xf32, #tpu.memory_space<vmem>>, vector<8x128xf32>,
    return
  }
  func.func @transform_0(%arg0: i32) -> (i32, i32) {
    %c0_i32 = arith.constant 0 : i32
    %c0_i32_0 = arith.constant 0 : i32
    return %arg0, %c0_i32 : i32, i32
  }
  func.func @transform_1(%arg0: i32) -> (i32, i32) {
    %c0_i32 = arith.constant 0 : i32
    %c0_i32_0 = arith.constant 0 : i32
    %c0_i32_1 = arith.constant 0 : i32
    return %c0_i32, %c0_i32_0 : i32, i32
  }
  func.func @transform_2(%arg0: i32) -> (i32, i32) {
    %c0_i32 = arith.constant 0 : i32
    %c0_i32_0 = arith.constant 0 : i32
    %c0_i32_1 = arith.constant 0 : i32
    return %c0_i32, %c0_i32_0 : i32, i32
  }
  func.func @transform_3(%arg0: i32) -> (i32, i32) {
    %c0_i32 = arith.constant 0 : i32
    %c0_i32_0 = arith.constant 0 : i32
    %c0_i32_1 = arith.constant 0 : i32
    return %c0_i32, %c0_i32_0 : i32, i32
  }
  func.func @transform_4(%arg0: i32) -> (i32, i32) {
    %c0_i32 = arith.constant 0 : i32
    %c0_i32_0 = arith.constant 0 : i32
    %c0_i32_1 = arith.constant 0 : i32
    return %c0_i32, %c0_i32_0 : i32, i32
  }
  func.func @transform_5(%arg0: i32) -> (i32, i32) {
    %c0_i32 = arith.constant 0 : i32
    %c0_i32_0 = arith.constant 0 : i32
    %c0_i32_1 = arith.constant 0 : i32
    return %c0_i32, %c0_i32_0 : i32, i32
  }
  func.func @transform_6(%arg0: i32) -> (i32, i32) {
    %c0_i32 = arith.constant 0 : i32
    %c0_i32_0 = arith.constant 0 : i32
    return %arg0, %c0_i32 : i32, i32
  }
}

</mosaic_0001>

<llo_original>
// kernel: tpu_custom_call.1
$region0: #{tpu_custom_call.1}
  #allocation0 [shape = 'u32[]', space=smem, size = 0x4, offset = 0x4, fixed_abs, tag = 'smem constant byte address 0x4 - core index']
  #allocation1 [shape = 'u32[144,128]{1,0:T(1,128)}', space=vmem, size = 0x12000, scoped, tag = 'internal scratch']
  %s0 = inlined_call_operand.hbm [shape: f32[8,16], index: 0, kind: input, shape index: {}]
  %s1 = inlined_call_operand.hbm [shape: bf16[16,128], index: 1, kind: input, shape index: {}]
  %s2 = inlined_call_operand.hbm [shape: bf16[128,128], index: 2, kind: input, shape index: {}]
  %s3 = inlined_call_operand.hbm [shape: bf16[128,128], index: 3, kind: input, shape index: {}]
  %s4 = inlined_call_operand.hbm [shape: bf16[128,128], index: 4, kind: input, shape index: {}]
  %s5 = inlined_call_operand.vmem [shape: f32[4,128], index: 5, kind: input, shape index: {}]
  %s6 = inlined_call_operand.hbm [shape: f32[8,128], index: 6, kind: output, shape index: {}]
  %s7 = sld [smem:[#allocation0]]
  $region54: #{tpu_custom_call.1} parent=0
    _
  %s9 = ssub.s32 1, %s7
  %s10 = scalar_select 0, %s9, %s7
  $region1: #{tpu_custom_call.1} parent=0
    #allocation2 [shape = 'u8[4096]{0}', space=vmem, size = 0x1000, scoped, tag = 'input window, operand 0, single buffered']
    #allocation3 [shape = 's32[1]{0}', space=sflag, size = 0x4, scoped, tag = 'scoped memory for tpu_custom_call.1']
    #allocation4 [shape = 's32[1]{0}', space=sflag, size = 0x4, scoped, tag = 'scoped memory for tpu_custom_call.1']
    #allocation5 [shape = 'u8[4096]{0}', space=vmem, size = 0x1000, scoped, tag = 'input window, operand 1, single buffered']
    #allocation6 [shape = 's32[1]{0}', space=sflag, size = 0x4, scoped, tag = 'scoped memory for tpu_custom_call.1']
    #allocation7 [shape = 'u8[32768]{0}', space=vmem, size = 0x8000, scoped, tag = 'input window, operand 2, single buffered']
    #allocation8 [shape = 'u8[32768]{0}', space=vmem, size = 0x8000, scoped, tag = 'input window, operand 3, single buffered']
    #allocation9 [shape = 's32[1]{0}', space=sflag, size = 0x4, scoped, tag = 'scoped memory for tpu_custom_call.1']
    #allocation10 [shape = 'u8[32768]{0}', space=vmem, size = 0x8000, scoped, tag = 'input window, operand 4, single buffered']
    #allocation11 [shape = 'u8[4096]{0}', space=vmem, size = 0x1000, scoped, tag = 'output window, operand 0, single buffered']
    %11 = vsyncpa [#allocation3], 0
    %12 = vsyncpa [#allocation6], 0
    %13 = vsyncpa [#allocation9], 0
    %14 = vsyncpa [#allocation4], 0
    // Predicated region
    $region2: #{tpu_custom_call.1} parent=1 // pred_check
      _
    $region3: #{tpu_custom_call.1} parent=1 // pred_check_branch
      %16 = sbr.rel (0) target = $region5
    $region4: #{tpu_custom_call.1} parent=1 // pred_region
      %s18 = ssub.s32 128, 128
      %19 = vsyncadd [#allocation3], %s18
      %s21 = sshll.u32 [#allocation2], 4
      %s22 = int_to_ptr.vmem [resolvable:$true] %s21
      %24 = dma.hbm_to_vmem [thread:$0]  %s0, 128, %s22, [#allocation3]
    $region5: #{tpu_custom_call.1} parent=1 // pred_fallthru
      _
    // Predicated region
    $region6: #{tpu_custom_call.1} parent=1 // pred_check
      _
    $region7: #{tpu_custom_call.1} parent=1 // pred_check_branch
      %26 = sbr.rel (0) target = $region9
    $region8: #{tpu_custom_call.1} parent=1 // pred_region
      %s28 = ssub.s32 128, 128
      %29 = vsyncadd [#allocation6], %s28
      %s30 = sshll.u32 [#allocation5], 4
      %s31 = int_to_ptr.vmem [resolvable:$true] %s30
      %36 = dma.hbm_to_vmem [thread:$0]  %s1, 128, %s31, [#allocation6], 64, 64, 4
    $region9: #{tpu_custom_call.1} parent=1 // pred_fallthru
      _
    // Predicated region
    $region10: #{tpu_custom_call.1} parent=1 // pred_check
      _
    $region11: #{tpu_custom_call.1} parent=1 // pred_check_branch
      %38 = sbr.rel (0) target = $region13
    $region12: #{tpu_custom_call.1} parent=1 // pred_region
      %s40 = ssub.s32 1024, 1024
      %41 = vsyncadd [#allocation6], %s40
      %s42 = sshll.u32 [#allocation7], 4
      %s43 = int_to_ptr.vmem [resolvable:$true] %s42
      %48 = dma.hbm_to_vmem [thread:$0]  %s2, 1024, %s43, [#allocation6], 64, 64, 4
    $region13: #{tpu_custom_call.1} parent=1 // pred_fallthru
      _
    // Predicated region
    $region14: #{tpu_custom_call.1} parent=1 // pred_check
      _
    $region15: #{tpu_custom_call.1} parent=1 // pred_check_branch
      %50 = sbr.rel (0) target = $region17
    $region16: #{tpu_custom_call.1} parent=1 // pred_region
      %s52 = ssub.s32 1024, 1024
      %53 = vsyncadd [#allocation9], %s52
      %s54 = sshll.u32 [#allocation8], 4
      %s55 = int_to_ptr.vmem [resolvable:$true] %s54
      %60 = dma.hbm_to_vmem [thread:$0]  %s3, 1024, %s55, [#allocation9], 64, 64, 4
    $region17: #{tpu_custom_call.1} parent=1 // pred_fallthru
      _
    // Predicated region
    $region18: #{tpu_custom_call.1} parent=1 // pred_check
      _
    $region19: #{tpu_custom_call.1} parent=1 // pred_check_branch
      %62 = sbr.rel (0) target = $region21
    $region20: #{tpu_custom_call.1} parent=1 // pred_region
      %s64 = ssub.s32 1024, 1024
      %65 = vsyncadd [#allocation9], %s64
      %s66 = sshll.u32 [#allocation10], 4
      %s67 = int_to_ptr.vmem [resolvable:$true] %s66
      %72 = dma.hbm_to_vmem [thread:$0]  %s4, 1024, %s67, [#allocation9], 64, 64, 4
    $region21: #{tpu_custom_call.1} parent=1 // pred_fallthru
      _
    // Predicated region
    $region22: #{tpu_custom_call.1} parent=1 // pred_check
      _
    $region23: #{tpu_custom_call.1} parent=1 // pred_check_branch
      %74 = sbr.rel (0) target = $region25
    $region24: #{tpu_custom_call.1} parent=1 // pred_region
      _
    $region25: #{tpu_custom_call.1} parent=1 // pred_fallthru
      _
    // Predicated region
    $region26: #{tpu_custom_call.1} parent=1 // pred_check
      _
    $region27: #{tpu_custom_call.1} parent=1 // pred_check_branch
      %76 = sbr.rel (0) target = $region29
    $region28: #{tpu_custom_call.1} parent=1 // pred_region
      %77 = dma.done [#allocation3], 128
    $region29: #{tpu_custom_call.1} parent=1 // pred_fallthru
      _
    // Predicated region
    $region30: #{tpu_custom_call.1} parent=1 // pred_check
      _
    $region31: #{tpu_custom_call.1} parent=1 // pred_check_branch
      %79 = sbr.rel (0) target = $region33
    $region32: #{tpu_custom_call.1} parent=1 // pred_region
      %80 = dma.done [#allocation6], 128
    $region33: #{tpu_custom_call.1} parent=1 // pred_fallthru
      _
    // Predicated region
    $region34: #{tpu_custom_call.1} parent=1 // pred_check
      _
    $region35: #{tpu_custom_call.1} parent=1 // pred_check_branch
      %82 = sbr.rel (0) target = $region37
    $region36: #{tpu_custom_call.1} parent=1 // pred_region
      %83 = dma.done [#allocation6], 1024
    $region37: #{tpu_custom_call.1} parent=1 // pred_fallthru
      _
    // Predicated region
    $region38: #{tpu_custom_call.1} parent=1 // pred_check
      _
    $region39: #{tpu_custom_call.1} parent=1 // pred_check_branch
      %85 = sbr.rel (0) target = $region41
    $region40: #{tpu_custom_call.1} parent=1 // pred_region
      %86 = dma.done [#allocation9], 1024
    $region41: #{tpu_custom_call.1} parent=1 // pred_fallthru
      _
    // Predicated region
    $region42: #{tpu_custom_call.1} parent=1 // pred_check
      _
    $region43: #{tpu_custom_call.1} parent=1 // pred_check_branch
      %88 = sbr.rel (0) target = $region45
    $region44: #{tpu_custom_call.1} parent=1 // pred_region
      %89 = dma.done [#allocation9], 1024
    $region45: #{tpu_custom_call.1} parent=1 // pred_fallthru
      _
    %v91 = vld [vmem:[%s5] sm:$0xf]
    %v92 = vld [vmem:[#allocation2] sm:$0xff]
    %v93 = vpack.c.bf16 %v92, %v92
    %v94 = vld [vmem:[#allocation5] sm:$0xf]
    %v95 = vld [vmem:[#allocation5 + $0x4] sm:$0xf]
    %v96 = vlaneseq
    %v97 = vshrl.u32 %v96, 7
    %v98 = vsub.s32 0, %v97
    %v99 = vrot.slane %v91, %v98
    %v102 = vunpack.c.l.b16 %v94
    %v103 = vunpack.c.l.b16 %v95
    %v104 = vpack.c.b16 %v103, %v102
    %vm106 = vcmask 130048
    %v108 = vsel %vm106, %v93, 0
    %110 = vmatprep.subr.bf16.mxu0 0
    %111 = vmatpush1.bf16.msra.mxu0 %v104
    %112 = vmatprep.subr.bf16.mxu0 0
    %113 = vmatpush1.bf16.msra.mxu0 0
    %114 = vmatprep.subr.bf16.mxu0 0
    %115 = vmatpush1.bf16.msra.mxu0 0
    %116 = vmatprep.subr.bf16.mxu0 0
    %117 = vmatpush1.bf16.msra.mxu0 0
    %118 = vmatprep.subr.bf16.mxu0 0
    %119 = vmatpush1.bf16.msra.mxu0 0
    %120 = vmatprep.subr.bf16.mxu0 0
    %121 = vmatpush1.bf16.msra.mxu0 0
    %122 = vmatprep.subr.bf16.mxu0 0
    %123 = vmatpush1.bf16.msra.mxu0 0
    %124 = vmatprep.subr.bf16.mxu0 0
    %125 = vmatpush1.bf16.msra.mxu0 0
    %126 = vmatprep.subr.bf16.mxu0 0
    %127 = vmatpush1.bf16.msra.mxu0 0
    %128 = vmatprep.subr.bf16.mxu0 0
    %129 = vmatpush1.bf16.msra.mxu0 0
    %130 = vmatprep.subr.bf16.mxu0 0
    %131 = vmatpush1.bf16.msra.mxu0 0
    %132 = vmatprep.subr.bf16.mxu0 0
    %133 = vmatpush1.bf16.msra.mxu0 0
    %134 = vmatprep.subr.bf16.mxu0 0
    %135 = vmatpush1.bf16.msra.mxu0 0
    %136 = vmatprep.subr.bf16.mxu0 0
    %137 = vmatpush1.bf16.msra.mxu0 0
    %138 = vmatprep.subr.bf16.mxu0 0
    %139 = vmatpush1.bf16.msra.mxu0 0
    %140 = vmatprep.subr.bf16.mxu0 0
    %141 = vmatpush1.bf16.msra.mxu0 0
    %142 = vmatprep.mubr.bf16.mxu0 0
    %143 = vmatmul.mubr.bf16.gmra.mrb[0].mxu0 %v108
    %v144 = vpop.f32.mrb[0].mxu0
    %v145 = vadd.f32 %v99, %v144
    %v146 = vpop.f32.mrb[0].mxu0
    %v147 = vpop.f32.mrb[0].mxu0
    %v148 = vpop.f32.mrb[0].mxu0
    %149 = vdwg.mxu0
    %v150 = vmax.f32 %v145, 0.0
    %v151 = vpack.c.bf16 %v150, %v150
    %v152 = vld [vmem:[#allocation7] sm:$0xf]
    %v153 = vld [vmem:[#allocation7 + $0x4] sm:$0xf]
    %v154 = vld [vmem:[#allocation7 + $0x8] sm:$0xf]
    %v155 = vld [vmem:[#allocation7 + $0xc] sm:$0xf]
    %v156 = vld [vmem:[#allocation7 + $0x10] sm:$0xf]
    %v157 = vld [vmem:[#allocation7 + $0x14] sm:$0xf]
    %v158 = vld [vmem:[#allocation7 + $0x18] sm:$0xf]
    %v159 = vld [vmem:[#allocation7 + $0x1c] sm:$0xf]
    %v160 = vld [vmem:[#allocation7 + $0x20] sm:$0xf]
    %v161 = vld [vmem:[#allocation7 + $0x24] sm:$0xf]
    %v162 = vld [vmem:[#allocation7 + $0x28] sm:$0xf]
    %v163 = vld [vmem:[#allocation7 + $0x2c] sm:$0xf]
    %v164 = vld [vmem:[#allocation7 + $0x30] sm:$0xf]
    %v165 = vld [vmem:[#allocation7 + $0x34] sm:$0xf]
    %v166 = vld [vmem:[#allocation7 + $0x38] sm:$0xf]
    %v167 = vld [vmem:[#allocation7 + $0x3c] sm:$0xf]
    %v168 = vlaneseq
    %v169 = vshrl.u32 %v168, 7
    %v170 = vsub.s32 1, %v169
    %v171 = vrot.slane %v91, %v170
    %v188 = vunpack.c.l.b16 %v152
    %v189 = vunpack.c.l.b16 %v153
    %v190 = vunpack.c.l.b16 %v154
    %v191 = vunpack.c.l.b16 %v155
    %v192 = vunpack.c.l.b16 %v156
    %v193 = vunpack.c.l.b16 %v157
    %v194 = vunpack.c.l.b16 %v158
    %v195 = vunpack.c.l.b16 %v159
    %v196 = vunpack.c.l.b16 %v160
    %v197 = vunpack.c.l.b16 %v161
    %v198 = vunpack.c.l.b16 %v162
    %v199 = vunpack.c.l.b16 %v163
    %v200 = vunpack.c.l.b16 %v164
    %v201 = vunpack.c.l.b16 %v165
    %v202 = vunpack.c.l.b16 %v166
    %v203 = vunpack.c.l.b16 %v167
    %v204 = vpack.c.b16 %v189, %v188
    %v205 = vpack.c.b16 %v191, %v190
    %v206 = vpack.c.b16 %v193, %v192
    %v207 = vpack.c.b16 %v195, %v194
    %v208 = vpack.c.b16 %v197, %v196
    %v209 = vpack.c.b16 %v199, %v198
    %v210 = vpack.c.b16 %v201, %v200
    %v211 = vpack.c.b16 %v203, %v202
    %220 = vmatprep.subr.bf16.mxu0 0
    %221 = vmatpush1.bf16.msra.mxu0 %v204
    %222 = vmatprep.subr.bf16.mxu0 0
    %223 = vmatpush1.bf16.msra.mxu0 %v205
    %224 = vmatprep.subr.bf16.mxu0 0
    %225 = vmatpush1.bf16.msra.mxu0 %v206
    %226 = vmatprep.subr.bf16.mxu0 0
    %227 = vmatpush1.bf16.msra.mxu0 %v207
    %228 = vmatprep.subr.bf16.mxu0 0
    %229 = vmatpush1.bf16.msra.mxu0 %v208
    %230 = vmatprep.subr.bf16.mxu0 0
    %231 = vmatpush1.bf16.msra.mxu0 %v209
    %232 = vmatprep.subr.bf16.mxu0 0
    %233 = vmatpush1.bf16.msra.mxu0 %v210
    %234 = vmatprep.subr.bf16.mxu0 0
    %235 = vmatpush1.bf16.msra.mxu0 %v211
    %236 = vmatprep.subr.bf16.mxu0 0
    %237 = vmatpush1.bf16.msra.mxu0 0
    %238 = vmatprep.subr.bf16.mxu0 0
    %239 = vmatpush1.bf16.msra.mxu0 0
    %240 = vmatprep.subr.bf16.mxu0 0
    %241 = vmatpush1.bf16.msra.mxu0 0
    %242 = vmatprep.subr.bf16.mxu0 0
    %243 = vmatpush1.bf16.msra.mxu0 0
    %244 = vmatprep.subr.bf16.mxu0 0
    %245 = vmatpush1.bf16.msra.mxu0 0
    %246 = vmatprep.subr.bf16.mxu0 0
    %247 = vmatpush1.bf16.msra.mxu0 0
    %248 = vmatprep.subr.bf16.mxu0 0
    %249 = vmatpush1.bf16.msra.mxu0 0
    %250 = vmatprep.subr.bf16.mxu0 0
    %251 = vmatpush1.bf16.msra.mxu0 0
    %252 = vmatprep.mubr.bf16.mxu0 0
    %253 = vmatmul.mubr.bf16.gmra.mrb[0].mxu0 %v151
    %v254 = vpop.f32.mrb[0].mxu0
    %v255 = vadd.f32 %v171, %v254
    %v256 = vpop.f32.mrb[0].mxu0
    %v257 = vpop.f32.mrb[0].mxu0
    %v258 = vpop.f32.mrb[0].mxu0
    %259 = vdwg.mxu0
    %v260 = vmax.f32 %v255, 0.0
    %v261 = vpack.c.bf16 %v260, %v260
    %v262 = vld [vmem:[#allocation8] sm:$0xf]
    %v263 = vld [vmem:[#allocation8 + $0x4] sm:$0xf]
    %v264 = vld [vmem:[#allocation8 + $0x8] sm:$0xf]
    %v265 = vld [vmem:[#allocation8 + $0xc] sm:$0xf]
    %v266 = vld [vmem:[#allocation8 + $0x10] sm:$0xf]
    %v267 = vld [vmem:[#allocation8 + $0x14] sm:$0xf]
    %v268 = vld [vmem:[#allocation8 + $0x18] sm:$0xf]
    %v269 = vld [vmem:[#allocation8 + $0x1c] sm:$0xf]
    %v270 = vld [vmem:[#allocation8 + $0x20] sm:$0xf]
    %v271 = vld [vmem:[#allocation8 + $0x24] sm:$0xf]
    %v272 = vld [vmem:[#allocation8 + $0x28] sm:$0xf]
    %v273 = vld [vmem:[#allocation8 + $0x2c] sm:$0xf]
    %v274 = vld [vmem:[#allocation8 + $0x30] sm:$0xf]
    %v275 = vld [vmem:[#allocation8 + $0x34] sm:$0xf]
    %v276 = vld [vmem:[#allocation8 + $0x38] sm:$0xf]
    %v277 = vld [vmem:[#allocation8 + $0x3c] sm:$0xf]
    %v278 = vlaneseq
    %v279 = vshrl.u32 %v278, 7
    %v280 = vsub.s32 2, %v279
    %v281 = vrot.slane %v91, %v280
    %v298 = vunpack.c.l.b16 %v262
    %v299 = vunpack.c.l.b16 %v263
    %v300 = vunpack.c.l.b16 %v264
    %v301 = vunpack.c.l.b16 %v265
    %v302 = vunpack.c.l.b16 %v266
    %v303 = vunpack.c.l.b16 %v267
    %v304 = vunpack.c.l.b16 %v268
    %v305 = vunpack.c.l.b16 %v269
    %v306 = vunpack.c.l.b16 %v270
    %v307 = vunpack.c.l.b16 %v271
    %v308 = vunpack.c.l.b16 %v272
    %v309 = vunpack.c.l.b16 %v273
    %v310 = vunpack.c.l.b16 %v274
    %v311 = vunpack.c.l.b16 %v275
    %v312 = vunpack.c.l.b16 %v276
    %v313 = vunpack.c.l.b16 %v277
    %v314 = vpack.c.b16 %v299, %v298
    %v315 = vpack.c.b16 %v301, %v300
    %v316 = vpack.c.b16 %v303, %v302
    %v317 = vpack.c.b16 %v305, %v304
    %v318 = vpack.c.b16 %v307, %v306
    %v319 = vpack.c.b16 %v309, %v308
    %v320 = vpack.c.b16 %v311, %v310
    %v321 = vpack.c.b16 %v313, %v312
    %330 = vmatprep.subr.bf16.mxu0 0
    %331 = vmatpush1.bf16.msra.mxu0 %v314
    %332 = vmatprep.subr.bf16.mxu0 0
    %333 = vmatpush1.bf16.msra.mxu0 %v315
    %334 = vmatprep.subr.bf16.mxu0 0
    %335 = vmatpush1.bf16.msra.mxu0 %v316
    %336 = vmatprep.subr.bf16.mxu0 0
    %337 = vmatpush1.bf16.msra.mxu0 %v317
    %338 = vmatprep.subr.bf16.mxu0 0
    %339 = vmatpush1.bf16.msra.mxu0 %v318
    %340 = vmatprep.subr.bf16.mxu0 0
    %341 = vmatpush1.bf16.msra.mxu0 %v319
    %342 = vmatprep.subr.bf16.mxu0 0
    %343 = vmatpush1.bf16.msra.mxu0 %v320
    %344 = vmatprep.subr.bf16.mxu0 0
    %345 = vmatpush1.bf16.msra.mxu0 %v321
    %346 = vmatprep.subr.bf16.mxu0 0
    %347 = vmatpush1.bf16.msra.mxu0 0
    %348 = vmatprep.subr.bf16.mxu0 0
    %349 = vmatpush1.bf16.msra.mxu0 0
    %350 = vmatprep.subr.bf16.mxu0 0
    %351 = vmatpush1.bf16.msra.mxu0 0
    %352 = vmatprep.subr.bf16.mxu0 0
    %353 = vmatpush1.bf16.msra.mxu0 0
    %354 = vmatprep.subr.bf16.mxu0 0
    %355 = vmatpush1.bf16.msra.mxu0 0
    %356 = vmatprep.subr.bf16.mxu0 0
    %357 = vmatpush1.bf16.msra.mxu0 0
    %358 = vmatprep.subr.bf16.mxu0 0
    %359 = vmatpush1.bf16.msra.mxu0 0
    %360 = vmatprep.subr.bf16.mxu0 0
    %361 = vmatpush1.bf16.msra.mxu0 0
    %362 = vmatprep.mubr.bf16.mxu0 0
    %363 = vmatmul.mubr.bf16.gmra.mrb[0].mxu0 %v261
    %v364 = vpop.f32.mrb[0].mxu0
    %v365 = vadd.f32 %v281, %v364
    %v366 = vpop.f32.mrb[0].mxu0
    %v367 = vpop.f32.mrb[0].mxu0
    %v368 = vpop.f32.mrb[0].mxu0
    %369 = vdwg.mxu0
    %v370 = vmax.f32 %v365, 0.0
    %v371 = vpack.c.bf16 %v370, %v370
    %v372 = vld [vmem:[#allocation10] sm:$0xf]
    %v373 = vld [vmem:[#allocation10 + $0x4] sm:$0xf]
    %v374 = vld [vmem:[#allocation10 + $0x8] sm:$0xf]
    %v375 = vld [vmem:[#allocation10 + $0xc] sm:$0xf]
    %v376 = vld [vmem:[#allocation10 + $0x10] sm:$0xf]
    %v377 = vld [vmem:[#allocation10 + $0x14] sm:$0xf]
    %v378 = vld [vmem:[#allocation10 + $0x18] sm:$0xf]
    %v379 = vld [vmem:[#allocation10 + $0x1c] sm:$0xf]
    %v380 = vld [vmem:[#allocation10 + $0x20] sm:$0xf]
    %v381 = vld [vmem:[#allocation10 + $0x24] sm:$0xf]
    %v382 = vld [vmem:[#allocation10 + $0x28] sm:$0xf]
    %v383 = vld [vmem:[#allocation10 + $0x2c] sm:$0xf]
    %v384 = vld [vmem:[#allocation10 + $0x30] sm:$0xf]
    %v385 = vld [vmem:[#allocation10 + $0x34] sm:$0xf]
    %v386 = vld [vmem:[#allocation10 + $0x38] sm:$0xf]
    %v387 = vld [vmem:[#allocation10 + $0x3c] sm:$0xf]
    %v388 = vlaneseq
    %v389 = vshrl.u32 %v388, 7
    %v390 = vsub.s32 3, %v389
    %v391 = vrot.slane %v91, %v390
    %v408 = vunpack.c.l.b16 %v372
    %v409 = vunpack.c.l.b16 %v373
    %v410 = vunpack.c.l.b16 %v374
    %v411 = vunpack.c.l.b16 %v375
    %v412 = vunpack.c.l.b16 %v376
    %v413 = vunpack.c.l.b16 %v377
    %v414 = vunpack.c.l.b16 %v378
    %v415 = vunpack.c.l.b16 %v379
    %v416 = vunpack.c.l.b16 %v380
    %v417 = vunpack.c.l.b16 %v381
    %v418 = vunpack.c.l.b16 %v382
    %v419 = vunpack.c.l.b16 %v383
    %v420 = vunpack.c.l.b16 %v384
    %v421 = vunpack.c.l.b16 %v385
    %v422 = vunpack.c.l.b16 %v386
    %v423 = vunpack.c.l.b16 %v387
    %v424 = vpack.c.b16 %v409, %v408
    %v425 = vpack.c.b16 %v411, %v410
    %v426 = vpack.c.b16 %v413, %v412
    %v427 = vpack.c.b16 %v415, %v414
    %v428 = vpack.c.b16 %v417, %v416
    %v429 = vpack.c.b16 %v419, %v418
    %v430 = vpack.c.b16 %v421, %v420
    %v431 = vpack.c.b16 %v423, %v422
    %440 = vmatprep.subr.bf16.mxu0 0
    %441 = vmatpush1.bf16.msra.mxu0 %v424
    %442 = vmatprep.subr.bf16.mxu0 0
    %443 = vmatpush1.bf16.msra.mxu0 %v425
    %444 = vmatprep.subr.bf16.mxu0 0
    %445 = vmatpush1.bf16.msra.mxu0 %v426
    %446 = vmatprep.subr.bf16.mxu0 0
    %447 = vmatpush1.bf16.msra.mxu0 %v427
    %448 = vmatprep.subr.bf16.mxu0 0
    %449 = vmatpush1.bf16.msra.mxu0 %v428
    %450 = vmatprep.subr.bf16.mxu0 0
    %451 = vmatpush1.bf16.msra.mxu0 %v429
    %452 = vmatprep.subr.bf16.mxu0 0
    %453 = vmatpush1.bf16.msra.mxu0 %v430
    %454 = vmatprep.subr.bf16.mxu0 0
    %455 = vmatpush1.bf16.msra.mxu0 %v431
    %456 = vmatprep.subr.bf16.mxu0 0
    %457 = vmatpush1.bf16.msra.mxu0 0
    %458 = vmatprep.subr.bf16.mxu0 0
    %459 = vmatpush1.bf16.msra.mxu0 0
    %460 = vmatprep.subr.bf16.mxu0 0
    %461 = vmatpush1.bf16.msra.mxu0 0
    %462 = vmatprep.subr.bf16.mxu0 0
    %463 = vmatpush1.bf16.msra.mxu0 0
    %464 = vmatprep.subr.bf16.mxu0 0
    %465 = vmatpush1.bf16.msra.mxu0 0
    %466 = vmatprep.subr.bf16.mxu0 0
    %467 = vmatpush1.bf16.msra.mxu0 0
    %468 = vmatprep.subr.bf16.mxu0 0
    %469 = vmatpush1.bf16.msra.mxu0 0
    %470 = vmatprep.subr.bf16.mxu0 0
    %471 = vmatpush1.bf16.msra.mxu0 0
    %472 = vmatprep.mubr.bf16.mxu0 0
    %473 = vmatmul.mubr.bf16.gmra.mrb[0].mxu0 %v371
    %v474 = vpop.f32.mrb[0].mxu0
    %v475 = vadd.f32 %v391, %v474
    %v476 = vpop.f32.mrb[0].mxu0
    %v477 = vpop.f32.mrb[0].mxu0
    %v478 = vpop.f32.mrb[0].mxu0
    %479 = vdwg.mxu0
    %480 = vst [vmem:[#allocation11] sm:$0xff] %v475
    // Predicated region
    $region46: #{tpu_custom_call.1} parent=1 // pred_check
      _
    $region47: #{tpu_custom_call.1} parent=1 // pred_check_branch
      %482 = sbr.rel (0) target = $region49
    $region48: #{tpu_custom_call.1} parent=1 // pred_region
      %s484 = ssub.s32 128, 128
      %485 = vsyncadd [#allocation4], %s484
      %s487 = sshll.u32 [#allocation11], 4
      %s488 = int_to_ptr.vmem [resolvable:$true] %s487
      %490 = dma.vmem_to_hbm [thread:$0]  %s488, 128, %s6, [#allocation4]
    $region49: #{tpu_custom_call.1} parent=1 // pred_fallthru
      _
    // Predicated region
    $region50: #{tpu_custom_call.1} parent=1 // pred_check
      _
    $region51: #{tpu_custom_call.1} parent=1 // pred_check_branch
      %492 = sbr.rel (0) target = $region53
    $region52: #{tpu_custom_call.1} parent=1 // pred_region
      %493 = dma.done [#allocation4], 128
    $region53: #{tpu_custom_call.1} parent=1 // pred_fallthru
      _
    %494 = vsyncpa [#allocation3], 1
    %495 = vsyncpa [#allocation6], 1
    %496 = vsyncpa [#allocation9], 1
    %497 = vsyncpa [#allocation4], 1

</llo_original>
